<compile_context>
chip_gen: v6e
topology: v6e:2x2x1
jax: 0.10.0
libtpu: 0.0.40
codegen_flags: <defaults>
</compile_context>

<pallas_src>
import jax
import jax.numpy as jnp
from jax import lax
from jax.experimental import pallas as pl
from jax.experimental.pallas import tpu as pltpu


def _round_up(n, m):
    return (n + m - 1) // m * m


def _mxu_lane_multiple():
    """256-wide MXU on v6e/v7x; 128 on v5e and older."""
    try:
        kind = jax.devices()[0].device_kind.lower()
    except Exception:
        return 128
    if any(tag in kind for tag in ("v2", "v3", "v4", "v5")):
        return 128
    return 256


def _pad_feature(n, mult):
    if n <= 128:
        return _round_up(n, 128)
    return _round_up(n, mult)


def _vmem_capacity_bytes():
    try:
        cap = getattr(pltpu.get_tpu_info(), "vmem_capacity_bytes", None)
        if cap:
            return int(cap)
    except Exception:
        pass
    return 64 * 1024 * 1024  # conservative (v7x per-TC)


def _make_kernel(latent_dim):
    """latent_dim = TRUE (unpadded) LayerNorm width."""
    inv_l = 1.0 / float(latent_dim)

    def kernel(
        # inputs
        x_ref,                   # (TB, Dp)  f32 (cast to bf16 in-kernel)
        w1_ref, b1_ref,          # (Dp, Hp) bf16, (1, Hp) f32
        w2_ref, b2_ref,          # (Hp, Lp) bf16, (1, Lp) f32
        gamma_ref, beta_ref,     # (1, Lp) f32,  (1, Lp) f32
        w3_ref, b3_ref,          # (Lp, Hp) bf16, (1, Hp) f32
        w4_ref, b4_ref,          # (Hp, Dp) bf16, (1, Dp) f32
        a_enc_ref, a_dec_ref,    # PReLU slopes in SMEM, shape (1,) f32
        # outputs
        enc_ref,                 # (TB, Lp)
        dec_ref,                 # (TB, Dp)
    ):
        x = x_ref[...].astype(jnp.bfloat16)          # dropout(eval) == identity
        a_e = a_enc_ref[0]
        a_d = a_dec_ref[0]

        # ---------------- Encoder ----------------
        h = jnp.dot(x, w1_ref[...], preferred_element_type=jnp.float32) + b1_ref[...]
        h = jnp.where(h >= 0.0, h, a_e * h)                                # PReLU

        z = jnp.dot(h.astype(jnp.bfloat16), w2_ref[...],
                    preferred_element_type=jnp.float32) + b2_ref[...]

        # ------ LayerNorm over the TRUE latent width (single pass, mask-free) ------
        # Padded lanes of z are exactly zero (zero-padded w2/b2) so both sums are exact;
        # padded enc lanes come out zero via zero-padded gamma/beta.
        mean = jnp.sum(z, axis=-1, keepdims=True) * inv_l
        var = jnp.maximum(
            jnp.sum(z * z, axis=-1, keepdims=True) * inv_l - mean * mean, 0.0)
        enc = (z - mean) * lax.rsqrt(var + 1e-5) * gamma_ref[...] + beta_ref[...]
        enc_ref[...] = enc.astype(enc_ref.dtype)

        # ---------------- Decoder ----------------
        h2 = jnp.dot(enc.astype(jnp.bfloat16), w3_ref[...],
                     preferred_element_type=jnp.float32) + b3_ref[...]
        h2 = jnp.where(h2 >= 0.0, h2, a_d * h2)                            # PReLU

        dec = jnp.dot(h2.astype(jnp.bfloat16), w4_ref[...],
                      preferred_element_type=jnp.float32) + b4_ref[...]
        dec_ref[...] = dec.astype(dec_ref.dtype)

    return kernel


def autoencoder_forward(x, params, *, max_block_batch=1024, out_dtype=jnp.float32):
    B, D_in = x.shape
    H = params["w1"].shape[1]
    L = params["w2"].shape[1]

    # Lane-dense feature padding (128; 256 on 256-wide-MXU chips when the dim > 128).
    mult = _mxu_lane_multiple()
    Dp = _pad_feature(D_in, mult)
    Hp = _pad_feature(H, mult)
    Lp = _pad_feature(L, mult)

    # ---- per-generation VMEM budget & batch tiling ----
    vmem_cap = _vmem_capacity_bytes()
    vmem_limit = int(vmem_cap * 0.85)
    budget = int(vmem_cap * 0.75)

    # Resident (single-buffered) parameter footprint.
    weight_bytes = 2 * (Dp * Hp + Hp * Lp + Lp * Hp + Hp * Dp) \
                 + 4 * (2 * Hp + 3 * Lp + Dp)
    if weight_bytes > budget:
        # TODO(synk): tile Hp/Dp with an extra "arbitrary" grid axis (accumulator pattern)
        # or split encoder/decoder into two pallas_calls when the weights no longer fit.
        raise ValueError(
            f"resident weights ({weight_bytes} B) exceed the VMEM budget ({budget} B)")

    out_isz = jnp.dtype(out_dtype).itemsize
    per_row = (
        2 * 4 * Dp                        # x tile (f32), double-buffered
        + 2 * out_isz * (Lp + Dp)         # enc/dec tiles, double-buffered
        + 4 * (2 * Hp + 2 * Lp + Dp)      # f32 intermediates (h, z, enc, h2, dec)
    )
    tb_cap = max(8, (budget - weight_bytes) // per_row)
    max_tb = max(8, min(max_block_batch, (tb_cap // 8) * 8))

    Bp0 = _round_up(B, 8)
    num_tiles = -(-Bp0 // max_tb)
    if num_tiles == 1 and Bp0 >= 16:
        num_tiles = 2                      # let "parallel" shard across v7x's 2 TCs
    TB = _round_up(-(-Bp0 // num_tiles), 8)
    Bp = num_tiles * TB
    grid = (num_tiles,)

    def pad2(a, r, c):
        return jnp.pad(a, ((0, r - a.shape[0]), (0, c - a.shape[1])))

    x_p = pad2(x.astype(jnp.float32), Bp, Dp)            # stays f32; cast in-kernel
    w1 = pad2(params["w1"], Dp, Hp); b1 = pad2(params["b1"], 1, Hp)
    w2 = pad2(params["w2"], Hp, Lp); b2 = pad2(params["b2"], 1, Lp)
    g  = pad2(params["gamma"], 1, Lp); be = pad2(params["beta"], 1, Lp)
    w3 = pad2(params["w3"], Lp, Hp); b3 = pad2(params["b3"], 1, Hp)
    w4 = pad2(params["w4"], Hp, Dp); b4 = pad2(params["b4"], 1, Dp)

    # Whole-array, single-copy VMEM residency for parameters (no double buffering).
    resident = pl.BlockSpec(memory_space=pltpu.MemorySpace.VMEM)
    smem = pl.BlockSpec(memory_space=pltpu.MemorySpace.SMEM)

    in_specs = [
        pl.BlockSpec((TB, Dp), lambda i: (i, 0)),   # x tile (streamed, double-buffered)
        resident, resident,                         # w1, b1
        resident, resident,                         # w2, b2
        resident, resident,                         # gamma, beta
        resident, resident,                         # w3, b3
        resident, resident,                         # w4, b4
        smem, smem,                                 # PReLU slopes
    ]
    out_specs = (
        pl.BlockSpec((TB, Lp), lambda i: (i, 0)),   # encoded
        pl.BlockSpec((TB, Dp), lambda i: (i, 0)),   # decoded
    )
    out_shape = (
        jax.ShapeDtypeStruct((Bp, Lp), out_dtype),
        jax.ShapeDtypeStruct((Bp, Dp), out_dtype),
    )

    matmul_flops = 2 * Bp * (Dp * Hp + Hp * Lp + Lp * Hp + Hp * Dp)
    io_bytes = weight_bytes + Bp * Dp * 4 + Bp * (Lp + Dp) * out_isz
    cost = pl.CostEstimate(
        flops=matmul_flops,
        transcendentals=Bp,                       # one rsqrt per row
        bytes_accessed=io_bytes,
    )

    enc_p, dec_p = pl.pallas_call(
        _make_kernel(L),
        out_shape=out_shape,
        grid=grid,
        in_specs=in_specs,
        out_specs=out_specs,
        compiler_params=pltpu.CompilerParams(
            dimension_semantics=("parallel",),
            vmem_limit_bytes=vmem_limit,
        ),
        cost_estimate=cost,
    )(
        x_p,
        w1, b1, w2, b2, g, be, w3, b3, w4, b4,
        params["a_enc"], params["a_dec"],
    )

    return enc_p[:B, :L].astype(jnp.float32), dec_p[:B, :D_in].astype(jnp.float32)


def init_params(key, input_dim, hidden_dim, latent_dim):
    ks = jax.random.split(key, 8)

    def linear(kw, kb, fan_in, fan_out):
        # torch-style uniform(-1/sqrt(fan_in), 1/sqrt(fan_in)); weight stored (in, out)
        bound = 1.0 / float(fan_in) ** 0.5
        w = jax.random.uniform(kw, (fan_in, fan_out), jnp.float32, -bound, bound)
        b = jax.random.uniform(kb, (1, fan_out), jnp.float32, -bound, bound)
        return w.astype(jnp.bfloat16), b               # weights kept bf16 (MXU-native)

    w1, b1 = linear(ks[0], ks[1], input_dim, hidden_dim)   # encoder.fc1
    w2, b2 = linear(ks[2], ks[3], hidden_dim, latent_dim)  # encoder.fc2
    w3, b3 = linear(ks[4], ks[5], latent_dim, hidden_dim)  # decoder.fc1
    w4, b4 = linear(ks[6], ks[7], hidden_dim, input_dim)   # decoder.fc2

    return dict(
        w1=w1, b1=b1, w2=w2, b2=b2,
        gamma=jnp.ones((1, latent_dim), jnp.float32),       # LayerNorm weight
        beta=jnp.zeros((1, latent_dim), jnp.float32),       # LayerNorm bias
        w3=w3, b3=b3, w4=w4, b4=b4,
        a_enc=jnp.full((1,), 0.25, jnp.float32),            # PReLU init (torch default)
        a_dec=jnp.full((1,), 0.25, jnp.float32),
    )


def reference_forward(x, p):
    """Pure-JAX reference using the same bf16 matmul operands / f32 accumulation."""
    def dot(a, w):
        return jnp.dot(a.astype(jnp.bfloat16), w, preferred_element_type=jnp.float32)

    h = dot(x, p["w1"]) + p["b1"]
    h = jnp.where(h >= 0.0, h, p["a_enc"][0] * h)
    z = dot(h, p["w2"]) + p["b2"]
    mean = jnp.mean(z, axis=-1, keepdims=True)
    var = jnp.mean((z - mean) ** 2, axis=-1, keepdims=True)
    enc = (z - mean) * lax.rsqrt(var + 1e-5) * p["gamma"] + p["beta"]
    h2 = dot(enc, p["w3"]) + p["b3"]
    h2 = jnp.where(h2 >= 0.0, h2, p["a_dec"][0] * h2)
    dec = dot(h2, p["w4"]) + p["b4"]
    return enc, dec


if __name__ == "__main__":
    key = jax.random.PRNGKey(0)
    k_x, k_p = jax.random.split(key)

    batch, input_dim, hidden_dim, latent_dim = 8, 64, 32, 16
    x = jax.random.normal(k_x, (batch, input_dim), jnp.float32)
    params = init_params(k_p, input_dim, hidden_dim, latent_dim)

    enc, dec = jax.block_until_ready(autoencoder_forward(x, params))

    enc_ref, dec_ref = reference_forward(x, params)
    assert enc.shape == (batch, latent_dim) and dec.shape == (batch, input_dim)
    assert jnp.allclose(enc, enc_ref, atol=5e-3, rtol=5e-3)
    assert jnp.allclose(dec, dec_ref, atol=5e-3, rtol=5e-3)

    print("KERNEL_OK")
</pallas_src>

<mosaic_0001>
module attributes {stable_mosaic.version = 11 : i64} {
  func.func @kernel(%arg0: i32, %arg1: memref<8x128xf32, #tpu.memory_space<vmem>>, %arg2: memref<128x128xbf16, #tpu.memory_space<vmem>>, %arg3: memref<1x128xf32, #tpu.memory_space<vmem>>, %arg4: memref<128x128xbf16, #tpu.memory_space<vmem>>, %arg5: memref<1x128xf32, #tpu.memory_space<vmem>>, %arg6: memref<1x128xf32, #tpu.memory_space<vmem>>, %arg7: memref<1x128xf32, #tpu.memory_space<vmem>>, %arg8: memref<128x128xbf16, #tpu.memory_space<vmem>>, %arg9: memref<1x128xf32, #tpu.memory_space<vmem>>, %arg10: memref<128x128xbf16, #tpu.memory_space<vmem>>, %arg11: memref<1x128xf32, #tpu.memory_space<vmem>>, %arg12: memref<1xf32, #tpu.memory_space<smem>>, %arg13: memref<1xf32, #tpu.memory_space<smem>>, %arg14: memref<8x128xf32, #tpu.memory_space<vmem>>, %arg15: memref<8x128xf32, #tpu.memory_space<vmem>>) attributes {dimension_semantics = [#tpu.dimension_semantics<parallel>], iteration_bounds = array<i64: 1>, scalar_prefetch = 0 : i64, scratch_operands = 0 : i64, tpu.core_type = #tpu.core_type<tc>, window_params = [{transform_indices = @transform_0, window_bounds = array<i64: 8, 128>}, {pipeline_mode = #tpu.pipeline_mode<synchronous>, transform_indices = @transform_1, window_bounds = array<i64: 128, 128>}, {pipeline_mode = #tpu.pipeline_mode<synchronous>, transform_indices = @transform_2, window_bounds = array<i64: 1, 128>}, {pipeline_mode = #tpu.pipeline_mode<synchronous>, transform_indices = @transform_3, window_bounds = array<i64: 128, 128>}, {pipeline_mode = #tpu.pipeline_mode<synchronous>, transform_indices = @transform_4, window_bounds = array<i64: 1, 128>}, {pipeline_mode = #tpu.pipeline_mode<synchronous>, transform_indices = @transform_5, window_bounds = array<i64: 1, 128>}, {pipeline_mode = #tpu.pipeline_mode<synchronous>, transform_indices = @transform_6, window_bounds = array<i64: 1, 128>}, {pipeline_mode = #tpu.pipeline_mode<synchronous>, transform_indices = @transform_7, window_bounds = array<i64: 128, 128>}, {pipeline_mode = #tpu.pipeline_mode<synchronous>, transform_indices = @transform_8, window_bounds = array<i64: 1, 128>}, {pipeline_mode = #tpu.pipeline_mode<synchronous>, transform_indices = @transform_9, window_bounds = array<i64: 128, 128>}, {pipeline_mode = #tpu.pipeline_mode<synchronous>, transform_indices = @transform_10, window_bounds = array<i64: 1, 128>}, {transform_indices = @transform_11, window_bounds = array<i64: 1>}, {transform_indices = @transform_12, window_bounds = array<i64: 1>}, {transform_indices = @transform_13, window_bounds = array<i64: 8, 128>}, {transform_indices = @transform_14, window_bounds = array<i64: 8, 128>}]} {
    %c0 = arith.constant 0 : index
    %c0_0 = arith.constant 0 : index
    %0 = vector.load %arg1[%c0, %c0_0] : memref<8x128xf32, #tpu.memory_space<vmem>>, vector<8x128xf32>
    %1 = arith.truncf %0 : vector<8x128xf32> to vector<8x128xbf16>
    %c0_1 = arith.constant 0 : index
    %2 = memref.load %arg12[%c0_1] : memref<1xf32, #tpu.memory_space<smem>>
    %c0_2 = arith.constant 0 : index
    %3 = memref.load %arg13[%c0_2] : memref<1xf32, #tpu.memory_space<smem>>
    %c0_3 = arith.constant 0 : index
    %c0_4 = arith.constant 0 : index
    %4 = vector.load %arg2[%c0_3, %c0_4] : memref<128x128xbf16, #tpu.memory_space<vmem>>, vector<128x128xbf16>
    %cst = arith.constant dense<0.000000e+00> : vector<8x128xf32>
    %5 = tpu.matmul %1, %4, %cst {dimension_numbers = #tpu.dot_dimension_numbers<[1], [0], [0], [1], [0, 0, 1, 1], [], []>} : vector<8x128xbf16>, vector<128x128xbf16>, vector<8x128xf32> -> vector<8x128xf32>
    %c0_5 = arith.constant 0 : index
    %c0_6 = arith.constant 0 : index
    %6 = vector.load %arg3[%c0_5, %c0_6] : memref<1x128xf32, #tpu.memory_space<vmem>>, vector<1x128xf32>
    %7 = vector.broadcast %6 : vector<1x128xf32> to vector<8x128xf32>
    %8 = arith.addf %5, %7 : vector<8x128xf32>
    %cst_7 = arith.constant 0.000000e+00 : f32
    %9 = vector.broadcast %cst_7 : f32 to vector<8x128xf32>
    %10 = arith.cmpf oge, %8, %9 : vector<8x128xf32>
    %11 = vector.broadcast %2 : f32 to vector<8x128xf32>
    %12 = arith.mulf %11, %8 : vector<8x128xf32>
    %13 = arith.select %10, %8, %12 : vector<8x128xi1>, vector<8x128xf32>
    %14 = arith.truncf %13 : vector<8x128xf32> to vector<8x128xbf16>
    %c0_8 = arith.constant 0 : index
    %c0_9 = arith.constant 0 : index
    %15 = vector.load %arg4[%c0_8, %c0_9] : memref<128x128xbf16, #tpu.memory_space<vmem>>, vector<128x128xbf16>
    %cst_10 = arith.constant dense<0.000000e+00> : vector<8x128xf32>
    %16 = tpu.matmul %14, %15, %cst_10 {dimension_numbers = #tpu.dot_dimension_numbers<[1], [0], [0], [1], [0, 0, 1, 1], [], []>} : vector<8x128xbf16>, vector<128x128xbf16>, vector<8x128xf32> -> vector<8x128xf32>
    %c0_11 = arith.constant 0 : index
    %c0_12 = arith.constant 0 : index
    %17 = vector.load %arg5[%c0_11, %c0_12] : memref<1x128xf32, #tpu.memory_space<vmem>>, vector<1x128xf32>
    %18 = vector.broadcast %17 : vector<1x128xf32> to vector<8x128xf32>
    %19 = arith.addf %16, %18 : vector<8x128xf32>
    %cst_13 = arith.constant dense<0.000000e+00> : vector<8xf32>
    %20 = vector.multi_reduction <add>, %19, %cst_13 [1] : vector<8x128xf32> to vector<8xf32>
    %21 = vector.shape_cast %20 : vector<8xf32> to vector<8x1xf32>
    %cst_14 = arith.constant 6.250000e-02 : f32
    %22 = vector.broadcast %cst_14 : f32 to vector<8x1xf32>
    %23 = arith.mulf %21, %22 : vector<8x1xf32>
    %24 = arith.mulf %19, %19 : vector<8x128xf32>
    %cst_15 = arith.constant dense<0.000000e+00> : vector<8xf32>
    %25 = vector.multi_reduction <add>, %24, %cst_15 [1] : vector<8x128xf32> to vector<8xf32>
    %26 = vector.shape_cast %25 : vector<8xf32> to vector<8x1xf32>
    %cst_16 = arith.constant 6.250000e-02 : f32
    %27 = vector.broadcast %cst_16 : f32 to vector<8x1xf32>
    %28 = arith.mulf %26, %27 : vector<8x1xf32>
    %29 = arith.mulf %23, %23 : vector<8x1xf32>
    %30 = arith.subf %28, %29 : vector<8x1xf32>
    %cst_17 = arith.constant 0.000000e+00 : f32
    %31 = vector.broadcast %cst_17 : f32 to vector<8x1xf32>
    %32 = arith.maximumf %30, %31 : vector<8x1xf32>
    %33 = vector.broadcast %23 : vector<8x1xf32> to vector<8x128xf32>
    %34 = arith.subf %19, %33 : vector<8x128xf32>
    %cst_18 = arith.constant 9.99999974E-6 : f32
    %35 = vector.broadcast %cst_18 : f32 to vector<8x1xf32>
    %36 = arith.addf %32, %35 : vector<8x1xf32>
    %37 = math.rsqrt %36 : vector<8x1xf32>
    %38 = vector.broadcast %37 : vector<8x1xf32> to vector<8x128xf32>
    %39 = arith.mulf %34, %38 : vector<8x128xf32>
    %c0_19 = arith.constant 0 : index
    %c0_20 = arith.constant 0 : index
    %40 = vector.load %arg6[%c0_19, %c0_20] : memref<1x128xf32, #tpu.memory_space<vmem>>, vector<1x128xf32>
    %41 = vector.broadcast %40 : vector<1x128xf32> to vector<8x128xf32>
    %42 = arith.mulf %39, %41 : vector<8x128xf32>
    %c0_21 = arith.constant 0 : index
    %c0_22 = arith.constant 0 : index
    %43 = vector.load %arg7[%c0_21, %c0_22] : memref<1x128xf32, #tpu.memory_space<vmem>>, vector<1x128xf32>
    %44 = vector.broadcast %43 : vector<1x128xf32> to vector<8x128xf32>
    %45 = arith.addf %42, %44 : vector<8x128xf32>
    %c0_23 = arith.constant 0 : index
    %c0_24 = arith.constant 0 : index
    %46 = vector.load %arg14[%c0_23, %c0_24] : memref<8x128xf32, #tpu.memory_space<vmem>>, vector<8x128xf32>
    tpu.vector_store %arg14[%c0_23, %c0_24], %45 {strides = array<i32>} : memref<8x128xf32, #tpu.memory_space<vmem>>, vector<8x128xf32>,
    %47 = arith.truncf %45 : vector<8x128xf32> to vector<8x128xbf16>
    %c0_25 = arith.constant 0 : index
    %c0_26 = arith.constant 0 : index
    %48 = vector.load %arg8[%c0_25, %c0_26] : memref<128x128xbf16, #tpu.memory_space<vmem>>, vector<128x128xbf16>
    %cst_27 = arith.constant dense<0.000000e+00> : vector<8x128xf32>
    %49 = tpu.matmul %47, %48, %cst_27 {dimension_numbers = #tpu.dot_dimension_numbers<[1], [0], [0], [1], [0, 0, 1, 1], [], []>} : vector<8x128xbf16>, vector<128x128xbf16>, vector<8x128xf32> -> vector<8x128xf32>
    %c0_28 = arith.constant 0 : index
    %c0_29 = arith.constant 0 : index
    %50 = vector.load %arg9[%c0_28, %c0_29] : memref<1x128xf32, #tpu.memory_space<vmem>>, vector<1x128xf32>
    %51 = vector.broadcast %50 : vector<1x128xf32> to vector<8x128xf32>
    %52 = arith.addf %49, %51 : vector<8x128xf32>
    %cst_30 = arith.constant 0.000000e+00 : f32
    %53 = vector.broadcast %cst_30 : f32 to vector<8x128xf32>
    %54 = arith.cmpf oge, %52, %53 : vector<8x128xf32>
    %55 = vector.broadcast %3 : f32 to vector<8x128xf32>
    %56 = arith.mulf %55, %52 : vector<8x128xf32>
    %57 = arith.select %54, %52, %56 : vector<8x128xi1>, vector<8x128xf32>
    %58 = arith.truncf %57 : vector<8x128xf32> to vector<8x128xbf16>
    %c0_31 = arith.constant 0 : index
    %c0_32 = arith.constant 0 : index
    %59 = vector.load %arg10[%c0_31, %c0_32] : memref<128x128xbf16, #tpu.memory_space<vmem>>, vector<128x128xbf16>
    %cst_33 = arith.constant dense<0.000000e+00> : vector<8x128xf32>
    %60 = tpu.matmul %58, %59, %cst_33 {dimension_numbers = #tpu.dot_dimension_numbers<[1], [0], [0], [1], [0, 0, 1, 1], [], []>} : vector<8x128xbf16>, vector<128x128xbf16>, vector<8x128xf32> -> vector<8x128xf32>
    %c0_34 = arith.constant 0 : index
    %c0_35 = arith.constant 0 : index
    %61 = vector.load %arg11[%c0_34, %c0_35] : memref<1x128xf32, #tpu.memory_space<vmem>>, vector<1x128xf32>
    %62 = vector.broadcast %61 : vector<1x128xf32> to vector<8x128xf32>
    %63 = arith.addf %60, %62 : vector<8x128xf32>
    %c0_36 = arith.constant 0 : index
    %c0_37 = arith.constant 0 : index
    %64 = vector.load %arg15[%c0_36, %c0_37] : memref<8x128xf32, #tpu.memory_space<vmem>>, vector<8x128xf32>
    tpu.vector_store %arg15[%c0_36, %c0_37], %63 {strides = array<i32>} : memref<8x128xf32, #tpu.memory_space<vmem>>, vector<8x128xf32>,
    return
  }
  func.func @transform_0(%arg0: i32) -> (i32, i32) {
    %c0_i32 = arith.constant 0 : i32
    %c0_i32_0 = arith.constant 0 : i32
    return %arg0, %c0_i32 : i32, i32
  }
  func.func @transform_1(%arg0: i32) -> (i32, i32) {
    %c0_i32 = arith.constant 0 : i32
    %c0_i32_0 = arith.constant 0 : i32
    %c0_i32_1 = arith.constant 0 : i32
    return %c0_i32, %c0_i32_0 : i32, i32
  }
  func.func @transform_2(%arg0: i32) -> (i32, i32) {
    %c0_i32 = arith.constant 0 : i32
    %c0_i32_0 = arith.constant 0 : i32
    %c0_i32_1 = arith.constant 0 : i32
    return %c0_i32, %c0_i32_0 : i32, i32
  }
  func.func @transform_3(%arg0: i32) -> (i32, i32) {
    %c0_i32 = arith.constant 0 : i32
    %c0_i32_0 = arith.constant 0 : i32
    %c0_i32_1 = arith.constant 0 : i32
    return %c0_i32, %c0_i32_0 : i32, i32
  }
  func.func @transform_4(%arg0: i32) -> (i32, i32) {
    %c0_i32 = arith.constant 0 : i32
    %c0_i32_0 = arith.constant 0 : i32
    %c0_i32_1 = arith.constant 0 : i32
    return %c0_i32, %c0_i32_0 : i32, i32
  }
  func.func @transform_5(%arg0: i32) -> (i32, i32) {
    %c0_i32 = arith.constant 0 : i32
    %c0_i32_0 = arith.constant 0 : i32
    %c0_i32_1 = arith.constant 0 : i32
    return %c0_i32, %c0_i32_0 : i32, i32
  }
  func.func @transform_6(%arg0: i32) -> (i32, i32) {
    %c0_i32 = arith.constant 0 : i32
    %c0_i32_0 = arith.constant 0 : i32
    %c0_i32_1 = arith.constant 0 : i32
    return %c0_i32, %c0_i32_0 : i32, i32
  }
  func.func @transform_7(%arg0: i32) -> (i32, i32) {
    %c0_i32 = arith.constant 0 : i32
    %c0_i32_0 = arith.constant 0 : i32
    %c0_i32_1 = arith.constant 0 : i32
    return %c0_i32, %c0_i32_0 : i32, i32
  }
  func.func @transform_8(%arg0: i32) -> (i32, i32) {
    %c0_i32 = arith.constant 0 : i32
    %c0_i32_0 = arith.constant 0 : i32
    %c0_i32_1 = arith.constant 0 : i32
    return %c0_i32, %c0_i32_0 : i32, i32
  }
  func.func @transform_9(%arg0: i32) -> (i32, i32) {
    %c0_i32 = arith.constant 0 : i32
    %c0_i32_0 = arith.constant 0 : i32
    %c0_i32_1 = arith.constant 0 : i32
    return %c0_i32, %c0_i32_0 : i32, i32
  }
  func.func @transform_10(%arg0: i32) -> (i32, i32) {
    %c0_i32 = arith.constant 0 : i32
    %c0_i32_0 = arith.constant 0 : i32
    %c0_i32_1 = arith.constant 0 : i32
    return %c0_i32, %c0_i32_0 : i32, i32
  }
  func.func @transform_11(%arg0: i32) -> i32 {
    %c0_i32 = arith.constant 0 : i32
    %c0_i32_0 = arith.constant 0 : i32
    return %c0_i32 : i32
  }
  func.func @transform_12(%arg0: i32) -> i32 {
    %c0_i32 = arith.constant 0 : i32
    %c0_i32_0 = arith.constant 0 : i32
    return %c0_i32 : i32
  }
  func.func @transform_13(%arg0: i32) -> (i32, i32) {
    %c0_i32 = arith.constant 0 : i32
    %c0_i32_0 = arith.constant 0 : i32
    return %arg0, %c0_i32 : i32, i32
  }
  func.func @transform_14(%arg0: i32) -> (i32, i32) {
    %c0_i32 = arith.constant 0 : i32
    %c0_i32_0 = arith.constant 0 : i32
    return %arg0, %c0_i32 : i32, i32
  }
}

</mosaic_0001>

<llo_original>
// kernel: tpu_custom_call.1
$region0: #{tpu_custom_call.1}
  #allocation0 [shape = 'u32[]', space=smem, size = 0x4, offset = 0x4, fixed_abs, tag = 'smem constant byte address 0x4 - core index']
  #allocation1 [shape = 'u32[144,128]{1,0:T(1,128)}', space=vmem, size = 0x12000, scoped, tag = 'internal scratch']
  #allocation2 [shape = 'f32[1]{0:T(128)S(6)}', space=smem, size = 0x200, scoped, tag = 'scoped memory for tpu_custom_call.1']
  #allocation3 [shape = 'f32[1]{0:T(128)S(6)}', space=smem, size = 0x200, scoped, tag = 'scoped memory for tpu_custom_call.1']
  %s0 = inlined_call_operand.hbm [shape: f32[8,128], index: 0, kind: input, shape index: {}]
  %s1 = inlined_call_operand.hbm [shape: bf16[128,128], index: 1, kind: input, shape index: {}]
  %s2 = inlined_call_operand.vmem [shape: f32[1,128], index: 2, kind: input, shape index: {}]
  %s3 = inlined_call_operand.hbm [shape: bf16[128,128], index: 3, kind: input, shape index: {}]
  %s4 = inlined_call_operand.vmem [shape: f32[1,128], index: 4, kind: input, shape index: {}]
  %s5 = inlined_call_operand.vmem [shape: f32[1,128], index: 5, kind: input, shape index: {}]
  %s6 = inlined_call_operand.vmem [shape: f32[1,128], index: 6, kind: input, shape index: {}]
  %s7 = inlined_call_operand.hbm [shape: bf16[128,128], index: 7, kind: input, shape index: {}]
  %s8 = inlined_call_operand.vmem [shape: f32[1,128], index: 8, kind: input, shape index: {}]
  %s9 = inlined_call_operand.hbm [shape: bf16[128,128], index: 9, kind: input, shape index: {}]
  %s10 = inlined_call_operand.vmem [shape: f32[1,128], index: 10, kind: input, shape index: {}]
  %s11 = inlined_call_operand.<no memory space> [shape: f32[1], index: 11, kind: input, shape index: {}]
  %s12 = inlined_call_operand.<no memory space> [shape: f32[1], index: 12, kind: input, shape index: {}]
  %s13 = inlined_call_operand.hbm [shape: f32[8,128], index: 13, kind: output, shape index: {0}]
  %s14 = inlined_call_operand.hbm [shape: f32[8,128], index: 14, kind: output, shape index: {1}]
  %15 = xla_tuple %s13, %s14
  %s16 = sld [smem:[#allocation0]]
  $region90: #{tpu_custom_call.1} parent=0
    _
  %s18 = ssub.s32 1, %s16
  %s19 = scalar_select 0, %s18, %s16
  %20 = sst [smem:[#allocation2]] %s11
  %21 = sst [smem:[#allocation3]] %s12
  $region1: #{tpu_custom_call.1} parent=0
    #allocation4 [shape = 'u8[4096]{0}', space=vmem, size = 0x1000, scoped, tag = 'input window, operand 0, single buffered']
    #allocation5 [shape = 's32[1]{0}', space=sflag, size = 0x4, scoped, tag = 'scoped memory for tpu_custom_call.1']
    #allocation6 [shape = 's32[1]{0}', space=sflag, size = 0x4, scoped, tag = 'scoped memory for tpu_custom_call.1']
    #allocation7 [shape = 'u8[32768]{0}', space=vmem, size = 0x8000, scoped, tag = 'input window, operand 1, single buffered']
    #allocation8 [shape = 's32[1]{0}', space=sflag, size = 0x4, scoped, tag = 'scoped memory for tpu_custom_call.1']
    #allocation9 [shape = 'u8[32768]{0}', space=vmem, size = 0x8000, scoped, tag = 'input window, operand 3, single buffered']
    #allocation10 [shape = 'u8[32768]{0}', space=vmem, size = 0x8000, scoped, tag = 'input window, operand 7, single buffered']
    #allocation11 [shape = 's32[1]{0}', space=sflag, size = 0x4, scoped, tag = 'scoped memory for tpu_custom_call.1']
    #allocation12 [shape = 'u8[32768]{0}', space=vmem, size = 0x8000, scoped, tag = 'input window, operand 9, single buffered']
    #allocation13 [shape = 'u8[4096]{0}', space=vmem, size = 0x1000, scoped, tag = 'output window, operand 0, single buffered']
    #allocation14 [shape = 'u8[4096]{0}', space=vmem, size = 0x1000, scoped, tag = 'output window, operand 1, single buffered']
    #allocation15 [shape = 's32[1]{0}', space=sflag, size = 0x4, scoped, tag = 'scoped memory for tpu_custom_call.1']
    %22 = vsyncpa [#allocation5], 0
    %23 = vsyncpa [#allocation8], 0
    %24 = vsyncpa [#allocation11], 0
    %25 = vsyncpa [#allocation6], 0
    %26 = vsyncpa [#allocation15], 0
    // Predicated region
    $region2: #{tpu_custom_call.1} parent=1 // pred_check
      _
    $region3: #{tpu_custom_call.1} parent=1 // pred_check_branch
      %28 = sbr.rel (0) target = $region5
    $region4: #{tpu_custom_call.1} parent=1 // pred_region
      %s30 = ssub.s32 128, 128
      %31 = vsyncadd [#allocation5], %s30
      %s33 = sshll.u32 [#allocation4], 4
      %s34 = int_to_ptr.vmem [resolvable:$true] %s33
      %36 = dma.hbm_to_vmem [thread:$0]  %s0, 128, %s34, [#allocation5]
    $region5: #{tpu_custom_call.1} parent=1 // pred_fallthru
      _
    // Predicated region
    $region6: #{tpu_custom_call.1} parent=1 // pred_check
      _
    $region7: #{tpu_custom_call.1} parent=1 // pred_check_branch
      %38 = sbr.rel (0) target = $region9
    $region8: #{tpu_custom_call.1} parent=1 // pred_region
      %s40 = ssub.s32 1024, 1024
      %41 = vsyncadd [#allocation8], %s40
      %s42 = sshll.u32 [#allocation7], 4
      %s43 = int_to_ptr.vmem [resolvable:$true] %s42
      %48 = dma.hbm_to_vmem [thread:$0]  %s1, 1024, %s43, [#allocation8], 64, 64, 4
    $region9: #{tpu_custom_call.1} parent=1 // pred_fallthru
      _
    // Predicated region
    $region10: #{tpu_custom_call.1} parent=1 // pred_check
      _
    $region11: #{tpu_custom_call.1} parent=1 // pred_check_branch
      %50 = sbr.rel (0) target = $region13
    $region12: #{tpu_custom_call.1} parent=1 // pred_region
      _
    $region13: #{tpu_custom_call.1} parent=1 // pred_fallthru
      _
    // Predicated region
    $region14: #{tpu_custom_call.1} parent=1 // pred_check
      _
    $region15: #{tpu_custom_call.1} parent=1 // pred_check_branch
      %52 = sbr.rel (0) target = $region17
    $region16: #{tpu_custom_call.1} parent=1 // pred_region
      %s54 = ssub.s32 1024, 1024
      %55 = vsyncadd [#allocation8], %s54
      %s56 = sshll.u32 [#allocation9], 4
      %s57 = int_to_ptr.vmem [resolvable:$true] %s56
      %62 = dma.hbm_to_vmem [thread:$0]  %s3, 1024, %s57, [#allocation8], 64, 64, 4
    $region17: #{tpu_custom_call.1} parent=1 // pred_fallthru
      _
    // Predicated region
    $region18: #{tpu_custom_call.1} parent=1 // pred_check
      _
    $region19: #{tpu_custom_call.1} parent=1 // pred_check_branch
      %64 = sbr.rel (0) target = $region21
    $region20: #{tpu_custom_call.1} parent=1 // pred_region
      _
    $region21: #{tpu_custom_call.1} parent=1 // pred_fallthru
      _
    // Predicated region
    $region22: #{tpu_custom_call.1} parent=1 // pred_check
      _
    $region23: #{tpu_custom_call.1} parent=1 // pred_check_branch
      %66 = sbr.rel (0) target = $region25
    $region24: #{tpu_custom_call.1} parent=1 // pred_region
      _
    $region25: #{tpu_custom_call.1} parent=1 // pred_fallthru
      _
    // Predicated region
    $region26: #{tpu_custom_call.1} parent=1 // pred_check
      _
    $region27: #{tpu_custom_call.1} parent=1 // pred_check_branch
      %68 = sbr.rel (0) target = $region29
    $region28: #{tpu_custom_call.1} parent=1 // pred_region
      _
    $region29: #{tpu_custom_call.1} parent=1 // pred_fallthru
      _
    // Predicated region
    $region30: #{tpu_custom_call.1} parent=1 // pred_check
      _
    $region31: #{tpu_custom_call.1} parent=1 // pred_check_branch
      %70 = sbr.rel (0) target = $region33
    $region32: #{tpu_custom_call.1} parent=1 // pred_region
      %s72 = ssub.s32 1024, 1024
      %73 = vsyncadd [#allocation11], %s72
      %s74 = sshll.u32 [#allocation10], 4
      %s75 = int_to_ptr.vmem [resolvable:$true] %s74
      %80 = dma.hbm_to_vmem [thread:$0]  %s7, 1024, %s75, [#allocation11], 64, 64, 4
    $region33: #{tpu_custom_call.1} parent=1 // pred_fallthru
      _
    // Predicated region
    $region34: #{tpu_custom_call.1} parent=1 // pred_check
      _
    $region35: #{tpu_custom_call.1} parent=1 // pred_check_branch
      %82 = sbr.rel (0) target = $region37
    $region36: #{tpu_custom_call.1} parent=1 // pred_region
      _
    $region37: #{tpu_custom_call.1} parent=1 // pred_fallthru
      _
    // Predicated region
    $region38: #{tpu_custom_call.1} parent=1 // pred_check
      _
    $region39: #{tpu_custom_call.1} parent=1 // pred_check_branch
      %84 = sbr.rel (0) target = $region41
    $region40: #{tpu_custom_call.1} parent=1 // pred_region
      %s86 = ssub.s32 1024, 1024
      %87 = vsyncadd [#allocation11], %s86
      %s88 = sshll.u32 [#allocation12], 4
      %s89 = int_to_ptr.vmem [resolvable:$true] %s88
      %94 = dma.hbm_to_vmem [thread:$0]  %s9, 1024, %s89, [#allocation11], 64, 64, 4
    $region41: #{tpu_custom_call.1} parent=1 // pred_fallthru
      _
    // Predicated region
    $region42: #{tpu_custom_call.1} parent=1 // pred_check
      _
    $region43: #{tpu_custom_call.1} parent=1 // pred_check_branch
      %96 = sbr.rel (0) target = $region45
    $region44: #{tpu_custom_call.1} parent=1 // pred_region
      _
    $region45: #{tpu_custom_call.1} parent=1 // pred_fallthru
      _
    // Predicated region
    $region46: #{tpu_custom_call.1} parent=1 // pred_check
      _
    $region47: #{tpu_custom_call.1} parent=1 // pred_check_branch
      %98 = sbr.rel (0) target = $region49
    $region48: #{tpu_custom_call.1} parent=1 // pred_region
      _
    $region49: #{tpu_custom_call.1} parent=1 // pred_fallthru
      _
    // Predicated region
    $region50: #{tpu_custom_call.1} parent=1 // pred_check
      _
    $region51: #{tpu_custom_call.1} parent=1 // pred_check_branch
      %100 = sbr.rel (0) target = $region53
    $region52: #{tpu_custom_call.1} parent=1 // pred_region
      _
    $region53: #{tpu_custom_call.1} parent=1 // pred_fallthru
      _
    // Predicated region
    $region54: #{tpu_custom_call.1} parent=1 // pred_check
      _
    $region55: #{tpu_custom_call.1} parent=1 // pred_check_branch
      %102 = sbr.rel (0) target = $region57
    $region56: #{tpu_custom_call.1} parent=1 // pred_region
      %103 = dma.done [#allocation5], 128
    $region57: #{tpu_custom_call.1} parent=1 // pred_fallthru
      _
    // Predicated region
    $region58: #{tpu_custom_call.1} parent=1 // pred_check
      _
    $region59: #{tpu_custom_call.1} parent=1 // pred_check_branch
      %105 = sbr.rel (0) target = $region61
    $region60: #{tpu_custom_call.1} parent=1 // pred_region
      %106 = dma.done [#allocation8], 1024
    $region61: #{tpu_custom_call.1} parent=1 // pred_fallthru
      _
    // Predicated region
    $region62: #{tpu_custom_call.1} parent=1 // pred_check
      _
    $region63: #{tpu_custom_call.1} parent=1 // pred_check_branch
      %108 = sbr.rel (0) target = $region65
    $region64: #{tpu_custom_call.1} parent=1 // pred_region
      %109 = dma.done [#allocation8], 1024
    $region65: #{tpu_custom_call.1} parent=1 // pred_fallthru
      _
    // Predicated region
    $region66: #{tpu_custom_call.1} parent=1 // pred_check
      _
    $region67: #{tpu_custom_call.1} parent=1 // pred_check_branch
      %111 = sbr.rel (0) target = $region69
    $region68: #{tpu_custom_call.1} parent=1 // pred_region
      %112 = dma.done [#allocation11], 1024
    $region69: #{tpu_custom_call.1} parent=1 // pred_fallthru
      _
    // Predicated region
    $region70: #{tpu_custom_call.1} parent=1 // pred_check
      _
    $region71: #{tpu_custom_call.1} parent=1 // pred_check_branch
      %114 = sbr.rel (0) target = $region73
    $region72: #{tpu_custom_call.1} parent=1 // pred_region
      %115 = dma.done [#allocation11], 1024
    $region73: #{tpu_custom_call.1} parent=1 // pred_fallthru
      _
    %v117 = vld [vmem:[#allocation4] sm:$0xff]
    %v118 = vpack.c.bf16 %v117, %v117
    %s119 = sld [smem:[#allocation2]]
    %s120 = sld [smem:[#allocation3]]
    %v121 = vld [vmem:[#allocation7] sm:$0xf]
    %v122 = vld [vmem:[#allocation7 + $0x4] sm:$0xf]
    %v123 = vld [vmem:[#allocation7 + $0x8] sm:$0xf]
    %v124 = vld [vmem:[#allocation7 + $0xc] sm:$0xf]
    %v125 = vld [vmem:[#allocation7 + $0x10] sm:$0xf]
    %v126 = vld [vmem:[#allocation7 + $0x14] sm:$0xf]
    %v127 = vld [vmem:[#allocation7 + $0x18] sm:$0xf]
    %v128 = vld [vmem:[#allocation7 + $0x1c] sm:$0xf]
    %v129 = vld [vmem:[#allocation7 + $0x20] sm:$0xf]
    %v130 = vld [vmem:[#allocation7 + $0x24] sm:$0xf]
    %v131 = vld [vmem:[#allocation7 + $0x28] sm:$0xf]
    %v132 = vld [vmem:[#allocation7 + $0x2c] sm:$0xf]
    %v133 = vld [vmem:[#allocation7 + $0x30] sm:$0xf]
    %v134 = vld [vmem:[#allocation7 + $0x34] sm:$0xf]
    %v135 = vld [vmem:[#allocation7 + $0x38] sm:$0xf]
    %v136 = vld [vmem:[#allocation7 + $0x3c] sm:$0xf]
    %v137 = vld [vmem:[%s2] sm:$0x1]
    %v139 = vlaneseq
    %v140 = vshrl.u32 %v139, 7
    %v141 = vsub.s32 0, %v140
    %v142 = vrot.slane %v137, %v141
    %v160 = vunpack.c.l.b16 %v121
    %v161 = vunpack.c.l.b16 %v122
    %v162 = vunpack.c.l.b16 %v123
    %v163 = vunpack.c.l.b16 %v124
    %v164 = vunpack.c.l.b16 %v125
    %v165 = vunpack.c.l.b16 %v126
    %v166 = vunpack.c.l.b16 %v127
    %v167 = vunpack.c.l.b16 %v128
    %v168 = vunpack.c.l.b16 %v129
    %v169 = vunpack.c.l.b16 %v130
    %v170 = vunpack.c.l.b16 %v131
    %v171 = vunpack.c.l.b16 %v132
    %v172 = vunpack.c.l.b16 %v133
    %v173 = vunpack.c.l.b16 %v134
    %v174 = vunpack.c.l.b16 %v135
    %v175 = vunpack.c.l.b16 %v136
    %v176 = vpack.c.b16 %v161, %v160
    %v177 = vpack.c.b16 %v163, %v162
    %v178 = vpack.c.b16 %v165, %v164
    %v179 = vpack.c.b16 %v167, %v166
    %v180 = vpack.c.b16 %v169, %v168
    %v181 = vpack.c.b16 %v171, %v170
    %v182 = vpack.c.b16 %v173, %v172
    %v183 = vpack.c.b16 %v175, %v174
    %192 = vmatprep.subr.bf16.mxu0 0
    %193 = vmatpush1.bf16.msra.mxu0 %v183
    %194 = vmatprep.subr.bf16.mxu0 0
    %195 = vmatpush1.bf16.msra.mxu0 %v182
    %196 = vmatprep.subr.bf16.mxu0 0
    %197 = vmatpush1.bf16.msra.mxu0 %v181
    %198 = vmatprep.subr.bf16.mxu0 0
    %199 = vmatpush1.bf16.msra.mxu0 %v180
    %200 = vmatprep.subr.bf16.mxu0 0
    %201 = vmatpush1.bf16.msra.mxu0 %v179
    %202 = vmatprep.subr.bf16.mxu0 0
    %203 = vmatpush1.bf16.msra.mxu0 %v178
    %204 = vmatprep.subr.bf16.mxu0 0
    %205 = vmatpush1.bf16.msra.mxu0 %v177
    %206 = vmatprep.subr.bf16.mxu0 0
    %207 = vmatpush1.bf16.msra.mxu0 %v176
    %208 = vmatprep.subr.bf16.mxu0 0
    %209 = vmatpush2.bf16.msra.mxu0 0
    %210 = vmatprep.subr.bf16.mxu0 0
    %211 = vmatpush2.bf16.msra.mxu0 0
    %212 = vmatprep.subr.bf16.mxu0 0
    %213 = vmatpush2.bf16.msra.mxu0 0
    %214 = vmatprep.subr.bf16.mxu0 0
    %215 = vmatpush2.bf16.msra.mxu0 0
    %216 = vmatprep.subr.bf16.mxu0 0
    %217 = vmatpush2.bf16.msra.mxu0 0
    %218 = vmatprep.subr.bf16.mxu0 0
    %219 = vmatpush2.bf16.msra.mxu0 0
    %220 = vmatprep.subr.bf16.mxu0 0
    %221 = vmatpush2.bf16.msra.mxu0 0
    %222 = vmatprep.subr.bf16.mxu0 0
    %223 = vmatpush2.bf16.msra.mxu0 0
    %224 = vmatprep.mubr.bf16.mxu0 0
    %225 = vmatmul.mubr.bf16.gmra.mxu0 %v118
    %v226 = vpop.f32.mrf.mxu0
    %v227 = vadd.f32 %v142, %v226
    %v228 = vpop.f32.mrf.mxu0
    %v229 = vpop.f32.mrf.mxu0
    %v230 = vpop.f32.mrf.mxu0
    %231 = vdwg.mxu0
    %vm232 = vcmp.ge.f32.partialorder %v227, 0.0
    %v233 = vstv %s119
    %v234 = vmul.f32 %v233, %v227
    %v235 = vsel %vm232, %v227, %v234
    %v236 = vpack.c.bf16 %v235, %v235
    %v237 = vld [vmem:[#allocation9] sm:$0xf]
    %v238 = vld [vmem:[#allocation9 + $0x4] sm:$0xf]
    %v239 = vld [vmem:[#allocation9 + $0x8] sm:$0xf]
    %v240 = vld [vmem:[#allocation9 + $0xc] sm:$0xf]
    %v241 = vld [vmem:[#allocation9 + $0x10] sm:$0xf]
    %v242 = vld [vmem:[#allocation9 + $0x14] sm:$0xf]
    %v243 = vld [vmem:[#allocation9 + $0x18] sm:$0xf]
    %v244 = vld [vmem:[#allocation9 + $0x1c] sm:$0xf]
    %v245 = vld [vmem:[#allocation9 + $0x20] sm:$0xf]
    %v246 = vld [vmem:[#allocation9 + $0x24] sm:$0xf]
    %v247 = vld [vmem:[#allocation9 + $0x28] sm:$0xf]
    %v248 = vld [vmem:[#allocation9 + $0x2c] sm:$0xf]
    %v249 = vld [vmem:[#allocation9 + $0x30] sm:$0xf]
    %v250 = vld [vmem:[#allocation9 + $0x34] sm:$0xf]
    %v251 = vld [vmem:[#allocation9 + $0x38] sm:$0xf]
    %v252 = vld [vmem:[#allocation9 + $0x3c] sm:$0xf]
    %v253 = vld [vmem:[%s4] sm:$0x1]
    %v255 = vlaneseq
    %v256 = vshrl.u32 %v255, 7
    %v257 = vsub.s32 0, %v256
    %v258 = vrot.slane %v253, %v257
    %v276 = vunpack.c.l.b16 %v237
    %v277 = vunpack.c.l.b16 %v238
    %v278 = vunpack.c.l.b16 %v239
    %v279 = vunpack.c.l.b16 %v240
    %v280 = vunpack.c.l.b16 %v241
    %v281 = vunpack.c.l.b16 %v242
    %v282 = vunpack.c.l.b16 %v243
    %v283 = vunpack.c.l.b16 %v244
    %v284 = vunpack.c.l.b16 %v245
    %v285 = vunpack.c.l.b16 %v246
    %v286 = vunpack.c.l.b16 %v247
    %v287 = vunpack.c.l.b16 %v248
    %v288 = vunpack.c.l.b16 %v249
    %v289 = vunpack.c.l.b16 %v250
    %v290 = vunpack.c.l.b16 %v251
    %v291 = vunpack.c.l.b16 %v252
    %v292 = vpack.c.b16 %v277, %v276
    %v293 = vpack.c.b16 %v279, %v278
    %v294 = vpack.c.b16 %v281, %v280
    %v295 = vpack.c.b16 %v283, %v282
    %v296 = vpack.c.b16 %v285, %v284
    %v297 = vpack.c.b16 %v287, %v286
    %v298 = vpack.c.b16 %v289, %v288
    %v299 = vpack.c.b16 %v291, %v290
    %308 = vmatprep.subr.bf16.mxu0 0
    %309 = vmatpush1.bf16.msra.mxu0 %v299
    %310 = vmatprep.subr.bf16.mxu0 0
    %311 = vmatpush1.bf16.msra.mxu0 %v298
    %312 = vmatprep.subr.bf16.mxu0 0
    %313 = vmatpush1.bf16.msra.mxu0 %v297
    %314 = vmatprep.subr.bf16.mxu0 0
    %315 = vmatpush1.bf16.msra.mxu0 %v296
    %316 = vmatprep.subr.bf16.mxu0 0
    %317 = vmatpush1.bf16.msra.mxu0 %v295
    %318 = vmatprep.subr.bf16.mxu0 0
    %319 = vmatpush1.bf16.msra.mxu0 %v294
    %320 = vmatprep.subr.bf16.mxu0 0
    %321 = vmatpush1.bf16.msra.mxu0 %v293
    %322 = vmatprep.subr.bf16.mxu0 0
    %323 = vmatpush1.bf16.msra.mxu0 %v292
    %324 = vmatprep.subr.bf16.mxu0 0
    %325 = vmatpush2.bf16.msra.mxu0 0
    %326 = vmatprep.subr.bf16.mxu0 0
    %327 = vmatpush2.bf16.msra.mxu0 0
    %328 = vmatprep.subr.bf16.mxu0 0
    %329 = vmatpush2.bf16.msra.mxu0 0
    %330 = vmatprep.subr.bf16.mxu0 0
    %331 = vmatpush2.bf16.msra.mxu0 0
    %332 = vmatprep.subr.bf16.mxu0 0
    %333 = vmatpush2.bf16.msra.mxu0 0
    %334 = vmatprep.subr.bf16.mxu0 0
    %335 = vmatpush2.bf16.msra.mxu0 0
    %336 = vmatprep.subr.bf16.mxu0 0
    %337 = vmatpush2.bf16.msra.mxu0 0
    %338 = vmatprep.subr.bf16.mxu0 0
    %339 = vmatpush2.bf16.msra.mxu0 0
    %340 = vmatprep.mubr.bf16.mxu0 0
    %341 = vmatmul.mubr.bf16.gmra.mxu0 %v236
    %v342 = vpop.f32.mrf.mxu0
    %v343 = vadd.f32 %v258, %v342
    %v344 = vpop.f32.mrf.mxu0
    %v345 = vpop.f32.mrf.mxu0
    %v346 = vpop.f32.mrf.mxu0
    %347 = vdwg.mxu0
    %348 = vadd.xlane.f32.xlu0 %v343
    %v349 = vpop.xlane.xlu0 %348
    %v350 = vmul.f32 %v349, 0.0625
    %v351 = vmul.f32 %v343, %v343
    %352 = vadd.xlane.f32.xlu0 %v351
    %v353 = vpop.xlane.xlu0 %352
    %v354 = vmul.f32 %v353, 0.0625
    %v355 = vmul.f32 %v350, %v350
    %v356 = vsub.f32 %v354, %v355
    %v357 = vmax.f32 %v356, 0.0
    %v358 = vsub.f32 %v343, %v350
    %v359 = vadd.f32 %v357, 1e-05
    %v360 = vrsqrt.pop %v359
    %v361 = vmul.f32 %v358, %v360
    %v362 = vld [vmem:[%s5] sm:$0x1]
    %v364 = vlaneseq
    %v365 = vshrl.u32 %v364, 7
    %v366 = vsub.s32 0, %v365
    %v367 = vrot.slane %v362, %v366
    %v369 = vmul.f32 %v361, %v367
    %v370 = vld [vmem:[%s6] sm:$0x1]
    %v372 = vlaneseq
    %v373 = vshrl.u32 %v372, 7
    %v374 = vsub.s32 0, %v373
    %v375 = vrot.slane %v370, %v374
    %v377 = vadd.f32 %v369, %v375
    %378 = vst [vmem:[#allocation13] sm:$0xff] %v377
    %v379 = vpack.c.bf16 %v377, %v377
    %v380 = vld [vmem:[#allocation10] sm:$0xf]
    %v381 = vld [vmem:[#allocation10 + $0x4] sm:$0xf]
    %v382 = vld [vmem:[#allocation10 + $0x8] sm:$0xf]
    %v383 = vld [vmem:[#allocation10 + $0xc] sm:$0xf]
    %v384 = vld [vmem:[#allocation10 + $0x10] sm:$0xf]
    %v385 = vld [vmem:[#allocation10 + $0x14] sm:$0xf]
    %v386 = vld [vmem:[#allocation10 + $0x18] sm:$0xf]
    %v387 = vld [vmem:[#allocation10 + $0x1c] sm:$0xf]
    %v388 = vld [vmem:[#allocation10 + $0x20] sm:$0xf]
    %v389 = vld [vmem:[#allocation10 + $0x24] sm:$0xf]
    %v390 = vld [vmem:[#allocation10 + $0x28] sm:$0xf]
    %v391 = vld [vmem:[#allocation10 + $0x2c] sm:$0xf]
    %v392 = vld [vmem:[#allocation10 + $0x30] sm:$0xf]
    %v393 = vld [vmem:[#allocation10 + $0x34] sm:$0xf]
    %v394 = vld [vmem:[#allocation10 + $0x38] sm:$0xf]
    %v395 = vld [vmem:[#allocation10 + $0x3c] sm:$0xf]
    %v396 = vld [vmem:[%s8] sm:$0x1]
    %v398 = vlaneseq
    %v399 = vshrl.u32 %v398, 7
    %v400 = vsub.s32 0, %v399
    %v401 = vrot.slane %v396, %v400
    %v419 = vunpack.c.l.b16 %v380
    %v420 = vunpack.c.l.b16 %v381
    %v421 = vunpack.c.l.b16 %v382
    %v422 = vunpack.c.l.b16 %v383
    %v423 = vunpack.c.l.b16 %v384
    %v424 = vunpack.c.l.b16 %v385
    %v425 = vunpack.c.l.b16 %v386
    %v426 = vunpack.c.l.b16 %v387
    %v427 = vunpack.c.l.b16 %v388
    %v428 = vunpack.c.l.b16 %v389
    %v429 = vunpack.c.l.b16 %v390
    %v430 = vunpack.c.l.b16 %v391
    %v431 = vunpack.c.l.b16 %v392
    %v432 = vunpack.c.l.b16 %v393
    %v433 = vunpack.c.l.b16 %v394
    %v434 = vunpack.c.l.b16 %v395
    %v435 = vpack.c.b16 %v420, %v419
    %v436 = vpack.c.b16 %v422, %v421
    %v437 = vpack.c.b16 %v424, %v423
    %v438 = vpack.c.b16 %v426, %v425
    %v439 = vpack.c.b16 %v428, %v427
    %v440 = vpack.c.b16 %v430, %v429
    %v441 = vpack.c.b16 %v432, %v431
    %v442 = vpack.c.b16 %v434, %v433
    %451 = vmatprep.subr.bf16.mxu0 0
    %452 = vmatpush1.bf16.msra.mxu0 %v442
    %453 = vmatprep.subr.bf16.mxu0 0
    %454 = vmatpush1.bf16.msra.mxu0 %v441
    %455 = vmatprep.subr.bf16.mxu0 0
    %456 = vmatpush1.bf16.msra.mxu0 %v440
    %457 = vmatprep.subr.bf16.mxu0 0
    %458 = vmatpush1.bf16.msra.mxu0 %v439
    %459 = vmatprep.subr.bf16.mxu0 0
    %460 = vmatpush1.bf16.msra.mxu0 %v438
    %461 = vmatprep.subr.bf16.mxu0 0
    %462 = vmatpush1.bf16.msra.mxu0 %v437
    %463 = vmatprep.subr.bf16.mxu0 0
    %464 = vmatpush1.bf16.msra.mxu0 %v436
    %465 = vmatprep.subr.bf16.mxu0 0
    %466 = vmatpush1.bf16.msra.mxu0 %v435
    %467 = vmatprep.subr.bf16.mxu0 0
    %468 = vmatpush2.bf16.msra.mxu0 0
    %469 = vmatprep.subr.bf16.mxu0 0
    %470 = vmatpush2.bf16.msra.mxu0 0
    %471 = vmatprep.subr.bf16.mxu0 0
    %472 = vmatpush2.bf16.msra.mxu0 0
    %473 = vmatprep.subr.bf16.mxu0 0
    %474 = vmatpush2.bf16.msra.mxu0 0
    %475 = vmatprep.subr.bf16.mxu0 0
    %476 = vmatpush2.bf16.msra.mxu0 0
    %477 = vmatprep.subr.bf16.mxu0 0
    %478 = vmatpush2.bf16.msra.mxu0 0
    %479 = vmatprep.subr.bf16.mxu0 0
    %480 = vmatpush2.bf16.msra.mxu0 0
    %481 = vmatprep.subr.bf16.mxu0 0
    %482 = vmatpush2.bf16.msra.mxu0 0
    %483 = vmatprep.mubr.bf16.mxu0 0
    %484 = vmatmul.mubr.bf16.gmra.mxu0 %v379
    %v485 = vpop.f32.mrf.mxu0
    %v486 = vadd.f32 %v401, %v485
    %v487 = vpop.f32.mrf.mxu0
    %v488 = vpop.f32.mrf.mxu0
    %v489 = vpop.f32.mrf.mxu0
    %490 = vdwg.mxu0
    %vm491 = vcmp.ge.f32.partialorder %v486, 0.0
    %v492 = vstv %s120
    %v493 = vmul.f32 %v492, %v486
    %v494 = vsel %vm491, %v486, %v493
    %v495 = vpack.c.bf16 %v494, %v494
    %v496 = vld [vmem:[#allocation12] sm:$0xf]
    %v497 = vld [vmem:[#allocation12 + $0x4] sm:$0xf]
    %v498 = vld [vmem:[#allocation12 + $0x8] sm:$0xf]
    %v499 = vld [vmem:[#allocation12 + $0xc] sm:$0xf]
    %v500 = vld [vmem:[#allocation12 + $0x10] sm:$0xf]
    %v501 = vld [vmem:[#allocation12 + $0x14] sm:$0xf]
    %v502 = vld [vmem:[#allocation12 + $0x18] sm:$0xf]
    %v503 = vld [vmem:[#allocation12 + $0x1c] sm:$0xf]
    %v504 = vld [vmem:[#allocation12 + $0x20] sm:$0xf]
    %v505 = vld [vmem:[#allocation12 + $0x24] sm:$0xf]
    %v506 = vld [vmem:[#allocation12 + $0x28] sm:$0xf]
    %v507 = vld [vmem:[#allocation12 + $0x2c] sm:$0xf]
    %v508 = vld [vmem:[#allocation12 + $0x30] sm:$0xf]
    %v509 = vld [vmem:[#allocation12 + $0x34] sm:$0xf]
    %v510 = vld [vmem:[#allocation12 + $0x38] sm:$0xf]
    %v511 = vld [vmem:[#allocation12 + $0x3c] sm:$0xf]
    %v512 = vld [vmem:[%s10] sm:$0x1]
    %v514 = vlaneseq
    %v515 = vshrl.u32 %v514, 7
    %v516 = vsub.s32 0, %v515
    %v517 = vrot.slane %v512, %v516
    %v535 = vunpack.c.l.b16 %v496
    %v536 = vunpack.c.l.b16 %v497
    %v537 = vunpack.c.l.b16 %v498
    %v538 = vunpack.c.l.b16 %v499
    %v539 = vunpack.c.l.b16 %v500
    %v540 = vunpack.c.l.b16 %v501
    %v541 = vunpack.c.l.b16 %v502
    %v542 = vunpack.c.l.b16 %v503
    %v543 = vunpack.c.l.b16 %v504
    %v544 = vunpack.c.l.b16 %v505
    %v545 = vunpack.c.l.b16 %v506
    %v546 = vunpack.c.l.b16 %v507
    %v547 = vunpack.c.l.b16 %v508
    %v548 = vunpack.c.l.b16 %v509
    %v549 = vunpack.c.l.b16 %v510
    %v550 = vunpack.c.l.b16 %v511
    %v551 = vpack.c.b16 %v536, %v535
    %v552 = vpack.c.b16 %v538, %v537
    %v553 = vpack.c.b16 %v540, %v539
    %v554 = vpack.c.b16 %v542, %v541
    %v555 = vpack.c.b16 %v544, %v543
    %v556 = vpack.c.b16 %v546, %v545
    %v557 = vpack.c.b16 %v548, %v547
    %v558 = vpack.c.b16 %v550, %v549
    %567 = vmatprep.subr.bf16.mxu0 0
    %568 = vmatpush1.bf16.msra.mxu0 %v558
    %569 = vmatprep.subr.bf16.mxu0 0
    %570 = vmatpush1.bf16.msra.mxu0 %v557
    %571 = vmatprep.subr.bf16.mxu0 0
    %572 = vmatpush1.bf16.msra.mxu0 %v556
    %573 = vmatprep.subr.bf16.mxu0 0
    %574 = vmatpush1.bf16.msra.mxu0 %v555
    %575 = vmatprep.subr.bf16.mxu0 0
    %576 = vmatpush1.bf16.msra.mxu0 %v554
    %577 = vmatprep.subr.bf16.mxu0 0
    %578 = vmatpush1.bf16.msra.mxu0 %v553
    %579 = vmatprep.subr.bf16.mxu0 0
    %580 = vmatpush1.bf16.msra.mxu0 %v552
    %581 = vmatprep.subr.bf16.mxu0 0
    %582 = vmatpush1.bf16.msra.mxu0 %v551
    %583 = vmatprep.subr.bf16.mxu0 0
    %584 = vmatpush2.bf16.msra.mxu0 0
    %585 = vmatprep.subr.bf16.mxu0 0
    %586 = vmatpush2.bf16.msra.mxu0 0
    %587 = vmatprep.subr.bf16.mxu0 0
    %588 = vmatpush2.bf16.msra.mxu0 0
    %589 = vmatprep.subr.bf16.mxu0 0
    %590 = vmatpush2.bf16.msra.mxu0 0
    %591 = vmatprep.subr.bf16.mxu0 0
    %592 = vmatpush2.bf16.msra.mxu0 0
    %593 = vmatprep.subr.bf16.mxu0 0
    %594 = vmatpush2.bf16.msra.mxu0 0
    %595 = vmatprep.subr.bf16.mxu0 0
    %596 = vmatpush2.bf16.msra.mxu0 0
    %597 = vmatprep.subr.bf16.mxu0 0
    %598 = vmatpush2.bf16.msra.mxu0 0
    %599 = vmatprep.mubr.bf16.mxu0 0
    %600 = vmatmul.mubr.bf16.gmra.mxu0 %v495
    %v601 = vpop.f32.mrf.mxu0
    %v602 = vadd.f32 %v517, %v601
    %v603 = vpop.f32.mrf.mxu0
    %v604 = vpop.f32.mrf.mxu0
    %v605 = vpop.f32.mrf.mxu0
    %606 = vdwg.mxu0
    %607 = vst [vmem:[#allocation14] sm:$0xff] %v602
    // Predicated region
    $region74: #{tpu_custom_call.1} parent=1 // pred_check
      _
    $region75: #{tpu_custom_call.1} parent=1 // pred_check_branch
      %609 = sbr.rel (0) target = $region77
    $region76: #{tpu_custom_call.1} parent=1 // pred_region
      %s611 = ssub.s32 128, 128
      %612 = vsyncadd [#allocation6], %s611
      %s614 = sshll.u32 [#allocation13], 4
      %s615 = int_to_ptr.vmem [resolvable:$true] %s614
      %617 = dma.vmem_to_hbm [thread:$0]  %s615, 128, %s13, [#allocation6]
    $region77: #{tpu_custom_call.1} parent=1 // pred_fallthru
      _
    // Predicated region
    $region78: #{tpu_custom_call.1} parent=1 // pred_check
      _
    $region79: #{tpu_custom_call.1} parent=1 // pred_check_branch
      %619 = sbr.rel (0) target = $region81
    $region80: #{tpu_custom_call.1} parent=1 // pred_region
      %s621 = ssub.s32 128, 128
      %622 = vsyncadd [#allocation15], %s621
      %s624 = sshll.u32 [#allocation14], 4
      %s625 = int_to_ptr.vmem [resolvable:$true] %s624
      %627 = dma.vmem_to_hbm [thread:$0]  %s625, 128, %s14, [#allocation15]
    $region81: #{tpu_custom_call.1} parent=1 // pred_fallthru
      _
    // Predicated region
    $region82: #{tpu_custom_call.1} parent=1 // pred_check
      _
    $region83: #{tpu_custom_call.1} parent=1 // pred_check_branch
      %629 = sbr.rel (0) target = $region85
    $region84: #{tpu_custom_call.1} parent=1 // pred_region
      %630 = dma.done [#allocation6], 128
    $region85: #{tpu_custom_call.1} parent=1 // pred_fallthru
      _
    // Predicated region
    $region86: #{tpu_custom_call.1} parent=1 // pred_check
      _
    $region87: #{tpu_custom_call.1} parent=1 // pred_check_branch
      %632 = sbr.rel (0) target = $region89
    $region88: #{tpu_custom_call.1} parent=1 // pred_region
      %633 = dma.done [#allocation15], 128
    $region89: #{tpu_custom_call.1} parent=1 // pred_fallthru
      _
    %634 = vsyncpa [#allocation5], 1
    %635 = vsyncpa [#allocation8], 1
    %636 = vsyncpa [#allocation11], 1
    %637 = vsyncpa [#allocation6], 1
    %638 = vsyncpa [#allocation15], 1

</llo_original>
